<compile_context>
chip_gen: v6e
topology: v6e:2x2x1
jax: 0.10.0
libtpu: 0.0.40
codegen_flags: <defaults>
</compile_context>

<pallas_src>
import jax
import jax.numpy as jnp
from jax.experimental import pallas as pl
from jax.experimental.pallas import tpu as pltpu

_LANE = 128
_NBUF = 4                      # outstanding HBM->HBM DMA chunks
_TARGET_CHUNK_BYTES = 4 << 20  # ~4 MiB per DMA chunk (byte-based, dtype-agnostic)


def _make_hbm_copy_kernel(rows: int, chunk_rows: int):
    """Kernel: chunked direct HBM->HBM DMA copy of a (rows, cols) slab."""
    n_chunks = -(-rows // chunk_rows)  # static ceil-div

    def kernel(x_ref, o_ref, sems):
        def _desc(i):
            lo = i * chunk_rows
            sz = min(chunk_rows, rows - lo)  # static ragged-tail handling
            return pltpu.make_async_copy(
                x_ref.at[pl.ds(lo, sz)],
                o_ref.at[pl.ds(lo, sz)],
                sems.at[i % _NBUF],
            )

        # Prime up to _NBUF outstanding copies, then wait/refill in order.
        for i in range(min(_NBUF, n_chunks)):
            _desc(i).start()
        for i in range(n_chunks):
            _desc(i).wait()
            nxt = i + _NBUF
            if nxt < n_chunks:
                _desc(nxt).start()

    return kernel


def _materialized_copy_2d(x2d: jax.Array) -> jax.Array:
    rows, cols = x2d.shape
    itemsize = jnp.dtype(x2d.dtype).itemsize
    # Byte-sized chunks (~4 MiB) keep every dtype/width combination at the DMA
    # sweet spot; nothing is staged through VMEM, so no generation-specific
    # vmem_limit_bytes tuning is needed.
    chunk_rows = max(1, _TARGET_CHUNK_BYTES // max(1, cols * itemsize))
    chunk_rows = min(chunk_rows, rows)
    total_bytes = rows * cols * itemsize
    return pl.pallas_call(
        _make_hbm_copy_kernel(rows, chunk_rows),
        out_shape=jax.ShapeDtypeStruct((rows, cols), x2d.dtype),
        in_specs=[pl.BlockSpec(memory_space=pl.ANY)],
        out_specs=pl.BlockSpec(memory_space=pl.ANY),
        scratch_shapes=[pltpu.SemaphoreType.DMA((_NBUF,))],
        cost_estimate=pl.CostEstimate(
            flops=0, transcendentals=0, bytes_accessed=2 * total_bytes),
    )(x2d)


def flatten_pallas(x: jax.Array, start_dim: int = 1,
                   materialize: bool = False) -> jax.Array:
    """Equivalent of torch.Tensor.flatten(start_dim=start_dim).

    Default path is a metadata-only reshape (zero HBM traffic — the optimal
    implementation of flatten).  Set materialize=True to force a freshly
    materialized output buffer via a direct HBM->HBM DMA copy kernel.
    """
    if start_dim < 0:
        start_dim += x.ndim
    lead = x.shape[:start_dim]
    flat = 1
    for d in x.shape[start_dim:]:
        flat *= d
    out_shape = lead + (flat,)

    if not materialize:
        # Flatten of a contiguous array is metadata-only; returning the
        # reshape is the globally optimal path on every TPU generation.
        return jnp.reshape(x, out_shape)

    total = 1
    for d in x.shape:
        total *= d
    if total == 0 or total % _LANE != 0:
        # TODO(synk): element counts not a multiple of 128 fall back to the
        # metadata reshape (no fresh buffer) to keep DMA descriptors simple;
        # flatten semantics remain exact.
        return jnp.reshape(x, out_shape)

    # Zero-cost, row-major-preserving 2-D view of the whole tensor; chunk
    # sizing is done in bytes so the lane width here is irrelevant for DMA.
    x2d = jnp.reshape(x, (total // _LANE, _LANE))
    out2d = _materialized_copy_2d(x2d)
    return jnp.reshape(out2d, out_shape)


if __name__ == "__main__":
    key = jax.random.PRNGKey(0)
    # NCHW input consistent with typical conv feature maps.
    x = jax.random.normal(key, (2, 4, 16, 16), dtype=jnp.float32)

    # Default (optimal) path: metadata-only reshape, no kernel launched.
    y = flatten_pallas(x, start_dim=1)
    y = jax.block_until_ready(y)

    # Materialized-copy path: exercises the Pallas HBM->HBM DMA kernel once.
    y_copy = flatten_pallas(x, start_dim=1, materialize=True)
    y_copy = jax.block_until_ready(y_copy)

    # Reference check against plain JAX reshape (== torch flatten semantics).
    y_ref = jnp.reshape(x, (x.shape[0], -1))
    assert y.shape == (2, 4 * 16 * 16), y.shape
    assert y.dtype == x.dtype
    assert jnp.array_equal(y, y_ref)
    assert y_copy.shape == y_ref.shape and y_copy.dtype == y_ref.dtype
    assert jnp.array_equal(y_copy, y_ref)

    print("KERNEL_OK")
</pallas_src>

<mosaic_0001>
module attributes {stable_mosaic.version = 11 : i64} {
  func.func @kernel(%arg0: memref<16x128xf32, #tpu.memory_space<any>>, %arg1: memref<16x128xf32, #tpu.memory_space<any>>, %arg2: memref<4x!tpu.dma_semaphore, #tpu.memory_space<semaphore_mem>>) attributes {dimension_semantics = [], scalar_prefetch = 0 : i64, scratch_operands = 1 : i64, tpu.core_type = #tpu.core_type<tc>} {
    %c0_i32 = arith.constant 0 : i32
    %c0_i32_0 = arith.constant 0 : i32
    %c0_i32_1 = arith.constant 0 : i32
    %0 = tpu.memref_slice %arg0[%c0_i32_0, %c0_i32_1] : memref<16x128xf32, #tpu.memory_space<any>> -> memref<16x128xf32, #tpu.memory_space<any>>
    %c0_i32_2 = arith.constant 0 : i32
    %c0_i32_3 = arith.constant 0 : i32
    %1 = tpu.memref_slice %arg1[%c0_i32_2, %c0_i32_3] : memref<16x128xf32, #tpu.memory_space<any>> -> memref<16x128xf32, #tpu.memory_space<any>>
    %2 = tpu.memref_slice %arg2[%c0_i32] : memref<4x!tpu.dma_semaphore, #tpu.memory_space<semaphore_mem>> -> memref<1x!tpu.dma_semaphore, #tpu.memory_space<semaphore_mem>>
    %3 = tpu.memref_squeeze %2 : memref<1x!tpu.dma_semaphore, #tpu.memory_space<semaphore_mem>> -> memref<!tpu.dma_semaphore, #tpu.memory_space<semaphore_mem>>
    tpu.enqueue_dma source(%0 : memref<16x128xf32, #tpu.memory_space<any>>) target(%1 : memref<16x128xf32, #tpu.memory_space<any>>) target_semaphore(%3 : memref<!tpu.dma_semaphore, #tpu.memory_space<semaphore_mem>>)
    %c0_i32_4 = arith.constant 0 : i32
    %c0_i32_5 = arith.constant 0 : i32
    %c0_i32_6 = arith.constant 0 : i32
    %4 = tpu.memref_slice %arg0[%c0_i32_5, %c0_i32_6] : memref<16x128xf32, #tpu.memory_space<any>> -> memref<16x128xf32, #tpu.memory_space<any>>
    %c0_i32_7 = arith.constant 0 : i32
    %c0_i32_8 = arith.constant 0 : i32
    %5 = tpu.memref_slice %arg1[%c0_i32_7, %c0_i32_8] : memref<16x128xf32, #tpu.memory_space<any>> -> memref<16x128xf32, #tpu.memory_space<any>>
    %6 = tpu.memref_slice %arg2[%c0_i32_4] : memref<4x!tpu.dma_semaphore, #tpu.memory_space<semaphore_mem>> -> memref<1x!tpu.dma_semaphore, #tpu.memory_space<semaphore_mem>>
    %7 = tpu.memref_squeeze %6 : memref<1x!tpu.dma_semaphore, #tpu.memory_space<semaphore_mem>> -> memref<!tpu.dma_semaphore, #tpu.memory_space<semaphore_mem>>
    tpu.wait_dma2 semaphore(%7 : memref<!tpu.dma_semaphore, #tpu.memory_space<semaphore_mem>>) src(%4 : memref<16x128xf32, #tpu.memory_space<any>>) dst(%5 : memref<16x128xf32, #tpu.memory_space<any>>)
    return
  }
}

</mosaic_0001>

<llo_original>
// kernel: tpu_custom_call.1
$region0: #{tpu_custom_call.1}
  #allocation0 [shape = 'u32[]', space=smem, size = 0x4, offset = 0x4, fixed_abs, tag = 'smem constant byte address 0x4 - core index']
  #allocation1 [shape = 'u32[144,128]{1,0:T(1,128)}', space=vmem, size = 0x12000, scoped, tag = 'internal scratch']
  #allocation2 [shape = 's32[4]{0}', space=sflag, size = 0x10, scoped, tag = 'scratch operand']
  #allocation3 [shape = 's32[]', space=sflag, size = 0x4, offset = 0, fixed_abs, tag = 'sflag constant byte address 0x0 - dummy sync flag']
  #allocation4 [shape = 'u32[0]{0}', space=smem, size = 0, offset = 0, fixed_abs, tag = 'smem constant byte address 0x0 - null']
  %s0 = inlined_call_operand.hbm [shape: f32[16,128], index: 0, kind: input, shape index: {}]
  %s1 = inlined_call_operand.hbm [shape: f32[16,128], index: 1, kind: output, shape index: {}]
  %s2 = sld [smem:[#allocation0]]
  $region2: #{tpu_custom_call.1} parent=0
    _
  %s4 = ssub.s32 1, %s2
  %s5 = scalar_select 0, %s4, %s2
  %s7 = sshll.u32 1, 14
  %s8 = sxor.u32 4294967295, %s7
  %12 = dma.general %s0, 256, %s1, [#allocation2], 131072, [#allocation4], 0, 0
  %s13 = smul.u32 16, 1
  %s14 = sshll.u32 %s13, 4
  %15 = dma.done [#allocation2], %s14
  %16 = vsyncmov [#allocation2]
  %s17 = vpop.sfrf %16
  %p18 = scmp.eq.s32.totalorder %s17, 0
  %p19 = pneg %p18
  %21 = shalt.err (%p19)
  %s22 = scalar_lea.sflag [#allocation2], 1
  %23 = vsyncmov %s22
  %s24 = vpop.sfrf %23
  %p25 = scmp.eq.s32.totalorder %s24, 0
  %p26 = pneg %p25
  %28 = shalt.err (%p26)
  %s29 = scalar_lea.sflag [#allocation2], 2
  %30 = vsyncmov %s29
  %s31 = vpop.sfrf %30
  %p32 = scmp.eq.s32.totalorder %s31, 0
  %p33 = pneg %p32
  %35 = shalt.err (%p33)
  %s36 = scalar_lea.sflag [#allocation2], 3
  %37 = vsyncmov %s36
  %s38 = vpop.sfrf %37
  %p39 = scmp.eq.s32.totalorder %s38, 0
  %p40 = pneg %p39
  %42 = shalt.err (%p40)

</llo_original>
